<compile_context>
chip_gen: v5e
topology: v5e:2x2
jax: 0.10.0
libtpu: 0.0.40
codegen_flags: <defaults>
</compile_context>

<pallas_src>
import functools

import jax
import jax.numpy as jnp
from jax.experimental import pallas as pl
from jax.experimental.pallas import tpu as pltpu

BN_EPS = 1e-5


# ---------------------------------------------------------------------------
# Fused conv_sic kernel.
# One grid step = one batch element x one strip of `th` output rows.
#   xp_ref  : (1, H+2p, W+2p, Cin)  halo-padded input (resident across strips)
#   dww_ref : (k, k, Cin)           depthwise weights, BN1 scale folded in
#   dwb_ref : (1, Cin)              depthwise bias,   BN1 folded in
#   pww_ref : (Cin, Cout)           1x1 weights, BN2 scale folded in
#   pwb_ref : (1, Cout)             1x1 bias,   BN2 folded in
#   o_ref   : (1, th, W, Cout)
# ---------------------------------------------------------------------------
def conv_sic_kernel(xp_ref, dww_ref, dwb_ref, pww_ref, pwb_ref, o_ref,
                    *, ksize, th, use_residual):
    pad = ksize // 2
    _, _, W, Cout = o_ref.shape
    Cin = xp_ref.shape[3]

    r = pl.program_id(1)
    row0 = r * th  # first output row of this strip

    # --- depthwise kxk conv (+ folded BN1), ref-indexed per tap -------------
    acc = jnp.zeros((th, W, Cin), jnp.float32)
    for di in range(ksize):            # static unrolled loop over kernel taps
        for dj in range(ksize):
            tap = xp_ref[0, pl.ds(row0 + di, th), pl.ds(dj, W), :]
            acc = acc + tap * dww_ref[di, dj, :]
    acc = acc + dwb_ref[0, :]

    # --- 1x1 conv (+ folded BN2) as one MXU matmul over the strip -----------
    h2 = acc.reshape(th * W, Cin)
    y = jnp.dot(h2, pww_ref[...], preferred_element_type=jnp.float32)
    y = y + pwb_ref[...]

    # --- residual (only when Cin == Cout) + ReLU -----------------------------
    if use_residual:
        res = xp_ref[0, pl.ds(row0 + pad, th), pl.ds(pad, W), :]
        y = y + res.reshape(th * W, Cin)

    o_ref[...] = jnp.maximum(y, 0.0).reshape(1, th, W, Cout).astype(o_ref.dtype)


# ---------------------------------------------------------------------------
# Wrapper / glue
# ---------------------------------------------------------------------------
def fold_bn(gamma, beta, mean, var):
    scale = gamma * jax.lax.rsqrt(var + BN_EPS)
    shift = beta - mean * scale
    return scale, shift


def _pick_row_tile(H, W):
    """Row-strip height: ~512 output pixels per strip, >=2 strips when possible."""
    target = max(1, 512 // max(W, 1))
    th = min(H, target)
    if th == H and H > 1:
        th = max(1, H // 2)
    while H % th != 0:
        th -= 1
    return th


def conv_sic_apply(x, p, ksize):
    """x: (N, H, W, Cin) NHWC -> (N, H, W, Cout). Fused single pallas_call."""
    N, H, W, Cin = x.shape
    Cout = p["pw_w"].shape[1]
    use_residual = (Cin == Cout)

    # Fold eval-mode BN into the conv parameters at trace time.
    s1, t1 = fold_bn(p["bn1_gamma"], p["bn1_beta"], p["bn1_mean"], p["bn1_var"])
    s2, t2 = fold_bn(p["bn2_gamma"], p["bn2_beta"], p["bn2_mean"], p["bn2_var"])
    dww = (p["dw_w"] * s1).astype(jnp.float32)                       # (k,k,Cin)
    dwb = (p["dw_b"] * s1 + t1).reshape(1, Cin).astype(jnp.float32)  # (1,Cin)
    pww = (p["pw_w"] * s2[None, :]).astype(jnp.float32)              # (Cin,Cout)
    pwb = (p["pw_b"] * s2 + t2).reshape(1, Cout).astype(jnp.float32) # (1,Cout)

    pad = ksize // 2
    xp = jnp.pad(x, ((0, 0), (pad, pad), (pad, pad), (0, 0)))
    Hp, Wp = H + 2 * pad, W + 2 * pad

    th = _pick_row_tile(H, W)
    R = H // th

    kern = functools.partial(conv_sic_kernel, ksize=ksize, th=th,
                             use_residual=use_residual)
    return pl.pallas_call(
        kern,
        out_shape=jax.ShapeDtypeStruct((N, H, W, Cout), jnp.float32),
        grid=(N, R),
        in_specs=[
            # Full padded image per batch element; resident across row strips.
            pl.BlockSpec((1, Hp, Wp, Cin), lambda n, r: (n, 0, 0, 0)),
            pl.BlockSpec((ksize, ksize, Cin), lambda n, r: (0, 0, 0)),
            pl.BlockSpec((1, Cin), lambda n, r: (0, 0)),
            pl.BlockSpec((Cin, Cout), lambda n, r: (0, 0)),
            pl.BlockSpec((1, Cout), lambda n, r: (0, 0)),
        ],
        out_specs=pl.BlockSpec((1, th, W, Cout), lambda n, r: (n, r, 0, 0)),
        compiler_params=pltpu.CompilerParams(
            dimension_semantics=("parallel", "parallel")),
    )(xp, dww, dwb, pww, pwb)


def basic_block_apply(x_nchw, params, ksize):
    """BasicBlock forward. x_nchw: (N, Cin, H, W) -> (N, Cout, H, W).

    The NCHW<->NHWC transposes are XLA-level; a surrounding NHWC model would
    avoid them entirely.
    """
    x = jnp.transpose(x_nchw, (0, 2, 3, 1))          # NCHW -> NHWC
    x = conv_sic_apply(x, params["block1"], ksize)   # conv_sic(Cin, Cin)  (residual)
    x = conv_sic_apply(x, params["block2"], ksize)   # conv_sic(Cin, Cout) (no residual)
    return jnp.transpose(x, (0, 3, 1, 2))            # NHWC -> NCHW


# ---------------------------------------------------------------------------
# Deterministic parameter init (shapes per nn.Module __init__)
# ---------------------------------------------------------------------------
def init_conv_sic_params(key, cin, cout, k):
    k_dw, k_dwb, k_pw, k_pwb = jax.random.split(key, 4)
    return {
        # depthwise conv: groups=cin -> one kxk filter per channel
        "dw_w": 0.1 * jax.random.normal(k_dw, (k, k, cin), jnp.float32),
        "dw_b": 0.05 * jax.random.normal(k_dwb, (cin,), jnp.float32),
        "bn1_gamma": jnp.ones((cin,), jnp.float32),
        "bn1_beta": jnp.zeros((cin,), jnp.float32),
        "bn1_mean": jnp.zeros((cin,), jnp.float32),
        "bn1_var": jnp.ones((cin,), jnp.float32),
        # 1x1 conv: (cin, cout)
        "pw_w": 0.1 * jax.random.normal(k_pw, (cin, cout), jnp.float32),
        "pw_b": 0.05 * jax.random.normal(k_pwb, (cout,), jnp.float32),
        "bn2_gamma": jnp.ones((cout,), jnp.float32),
        "bn2_beta": jnp.zeros((cout,), jnp.float32),
        "bn2_mean": jnp.zeros((cout,), jnp.float32),
        "bn2_var": jnp.ones((cout,), jnp.float32),
    }


if __name__ == "__main__":
    N, C_IN, C_OUT, H, W, K = 2, 4, 8, 16, 16, 3

    key = jax.random.PRNGKey(0)
    kx, kb1, kb2 = jax.random.split(key, 3)

    x = jax.random.normal(kx, (N, C_IN, H, W), jnp.float32)   # NCHW, like PyTorch

    params = {
        "block1": init_conv_sic_params(kb1, C_IN, C_IN, K),
        "block2": init_conv_sic_params(kb2, C_IN, C_OUT, K),
    }

    y = basic_block_apply(x, params, K)
    jax.block_until_ready(y)
    assert y.shape == (N, C_OUT, H, W)
    print("KERNEL_OK")
</pallas_src>

<mosaic_0001>
module attributes {stable_mosaic.version = 11 : i64} {
  func.func @conv_sic_kernel(%arg0: i32, %arg1: i32, %arg2: memref<1x18x18x4xf32, #tpu.memory_space<vmem>>, %arg3: memref<3x3x4xf32, #tpu.memory_space<vmem>>, %arg4: memref<1x4xf32, #tpu.memory_space<vmem>>, %arg5: memref<4x4xf32, #tpu.memory_space<vmem>>, %arg6: memref<1x4xf32, #tpu.memory_space<vmem>>, %arg7: memref<1x8x16x4xf32, #tpu.memory_space<vmem>>) attributes {dimension_semantics = [#tpu.dimension_semantics<parallel>, #tpu.dimension_semantics<parallel>], iteration_bounds = array<i64: 2, 2>, scalar_prefetch = 0 : i64, scratch_operands = 0 : i64, tpu.core_type = #tpu.core_type<tc>, window_params = [{transform_indices = @transform_0, window_bounds = array<i64: 1, 18, 18, 4>}, {pipeline_mode = #tpu.pipeline_mode<synchronous>, transform_indices = @transform_1, window_bounds = array<i64: 3, 3, 4>}, {pipeline_mode = #tpu.pipeline_mode<synchronous>, transform_indices = @transform_2, window_bounds = array<i64: 1, 4>}, {pipeline_mode = #tpu.pipeline_mode<synchronous>, transform_indices = @transform_3, window_bounds = array<i64: 4, 4>}, {pipeline_mode = #tpu.pipeline_mode<synchronous>, transform_indices = @transform_4, window_bounds = array<i64: 1, 4>}, {transform_indices = @transform_5, window_bounds = array<i64: 1, 8, 16, 4>}]} {
    %c8_i32 = arith.constant 8 : i32
    %0 = arith.muli %arg1, %c8_i32 : i32
    %cst = arith.constant 0.000000e+00 : f32
    %1 = vector.broadcast %cst : f32 to vector<8x16x4xf32>
    %c0_i32 = arith.constant 0 : i32
    %2 = arith.addi %0, %c0_i32 : i32
    %c0 = arith.constant 0 : index
    %3 = arith.index_cast %2 : i32 to index
    %c0_0 = arith.constant 0 : index
    %c0_1 = arith.constant 0 : index
    %4 = vector.load %arg2[%c0, %3, %c0_0, %c0_1] : memref<1x18x18x4xf32, #tpu.memory_space<vmem>>, vector<1x8x16x4xf32>
    %5 = vector.shape_cast %4 : vector<1x8x16x4xf32> to vector<8x16x4xf32>
    %c0_2 = arith.constant 0 : index
    %c0_3 = arith.constant 0 : index
    %c0_4 = arith.constant 0 : index
    %6 = vector.load %arg3[%c0_2, %c0_3, %c0_4] : memref<3x3x4xf32, #tpu.memory_space<vmem>>, vector<1x1x4xf32>
    %7 = vector.shape_cast %6 : vector<1x1x4xf32> to vector<4xf32>
    %8 = vector.shape_cast %7 : vector<4xf32> to vector<1x1x4xf32>
    %9 = vector.broadcast %8 : vector<1x1x4xf32> to vector<8x16x4xf32>
    %10 = arith.mulf %5, %9 : vector<8x16x4xf32>
    %11 = arith.addf %1, %10 : vector<8x16x4xf32>
    %c0_i32_5 = arith.constant 0 : i32
    %12 = arith.addi %0, %c0_i32_5 : i32
    %c0_6 = arith.constant 0 : index
    %13 = arith.index_cast %12 : i32 to index
    %c1 = arith.constant 1 : index
    %c0_7 = arith.constant 0 : index
    %14 = vector.load %arg2[%c0_6, %13, %c1, %c0_7] : memref<1x18x18x4xf32, #tpu.memory_space<vmem>>, vector<1x8x16x4xf32>
    %15 = vector.shape_cast %14 : vector<1x8x16x4xf32> to vector<8x16x4xf32>
    %c0_8 = arith.constant 0 : index
    %c1_9 = arith.constant 1 : index
    %c0_10 = arith.constant 0 : index
    %16 = vector.load %arg3[%c0_8, %c1_9, %c0_10] : memref<3x3x4xf32, #tpu.memory_space<vmem>>, vector<1x1x4xf32>
    %17 = vector.shape_cast %16 : vector<1x1x4xf32> to vector<4xf32>
    %18 = vector.shape_cast %17 : vector<4xf32> to vector<1x1x4xf32>
    %19 = vector.broadcast %18 : vector<1x1x4xf32> to vector<8x16x4xf32>
    %20 = arith.mulf %15, %19 : vector<8x16x4xf32>
    %21 = arith.addf %11, %20 : vector<8x16x4xf32>
    %c0_i32_11 = arith.constant 0 : i32
    %22 = arith.addi %0, %c0_i32_11 : i32
    %c0_12 = arith.constant 0 : index
    %23 = arith.index_cast %22 : i32 to index
    %c2 = arith.constant 2 : index
    %c0_13 = arith.constant 0 : index
    %24 = vector.load %arg2[%c0_12, %23, %c2, %c0_13] : memref<1x18x18x4xf32, #tpu.memory_space<vmem>>, vector<1x8x16x4xf32>
    %25 = vector.shape_cast %24 : vector<1x8x16x4xf32> to vector<8x16x4xf32>
    %c0_14 = arith.constant 0 : index
    %c2_15 = arith.constant 2 : index
    %c0_16 = arith.constant 0 : index
    %26 = vector.load %arg3[%c0_14, %c2_15, %c0_16] : memref<3x3x4xf32, #tpu.memory_space<vmem>>, vector<1x1x4xf32>
    %27 = vector.shape_cast %26 : vector<1x1x4xf32> to vector<4xf32>
    %28 = vector.shape_cast %27 : vector<4xf32> to vector<1x1x4xf32>
    %29 = vector.broadcast %28 : vector<1x1x4xf32> to vector<8x16x4xf32>
    %30 = arith.mulf %25, %29 : vector<8x16x4xf32>
    %31 = arith.addf %21, %30 : vector<8x16x4xf32>
    %c1_i32 = arith.constant 1 : i32
    %32 = arith.addi %0, %c1_i32 : i32
    %c0_17 = arith.constant 0 : index
    %33 = arith.index_cast %32 : i32 to index
    %c0_18 = arith.constant 0 : index
    %c0_19 = arith.constant 0 : index
    %34 = vector.load %arg2[%c0_17, %33, %c0_18, %c0_19] : memref<1x18x18x4xf32, #tpu.memory_space<vmem>>, vector<1x8x16x4xf32>
    %35 = vector.shape_cast %34 : vector<1x8x16x4xf32> to vector<8x16x4xf32>
    %c1_20 = arith.constant 1 : index
    %c0_21 = arith.constant 0 : index
    %c0_22 = arith.constant 0 : index
    %36 = vector.load %arg3[%c1_20, %c0_21, %c0_22] : memref<3x3x4xf32, #tpu.memory_space<vmem>>, vector<1x1x4xf32>
    %37 = vector.shape_cast %36 : vector<1x1x4xf32> to vector<4xf32>
    %38 = vector.shape_cast %37 : vector<4xf32> to vector<1x1x4xf32>
    %39 = vector.broadcast %38 : vector<1x1x4xf32> to vector<8x16x4xf32>
    %40 = arith.mulf %35, %39 : vector<8x16x4xf32>
    %41 = arith.addf %31, %40 : vector<8x16x4xf32>
    %c1_i32_23 = arith.constant 1 : i32
    %42 = arith.addi %0, %c1_i32_23 : i32
    %c0_24 = arith.constant 0 : index
    %43 = arith.index_cast %42 : i32 to index
    %c1_25 = arith.constant 1 : index
    %c0_26 = arith.constant 0 : index
    %44 = vector.load %arg2[%c0_24, %43, %c1_25, %c0_26] : memref<1x18x18x4xf32, #tpu.memory_space<vmem>>, vector<1x8x16x4xf32>
    %45 = vector.shape_cast %44 : vector<1x8x16x4xf32> to vector<8x16x4xf32>
    %c1_27 = arith.constant 1 : index
    %c1_28 = arith.constant 1 : index
    %c0_29 = arith.constant 0 : index
    %46 = vector.load %arg3[%c1_27, %c1_28, %c0_29] : memref<3x3x4xf32, #tpu.memory_space<vmem>>, vector<1x1x4xf32>
    %47 = vector.shape_cast %46 : vector<1x1x4xf32> to vector<4xf32>
    %48 = vector.shape_cast %47 : vector<4xf32> to vector<1x1x4xf32>
    %49 = vector.broadcast %48 : vector<1x1x4xf32> to vector<8x16x4xf32>
    %50 = arith.mulf %45, %49 : vector<8x16x4xf32>
    %51 = arith.addf %41, %50 : vector<8x16x4xf32>
    %c1_i32_30 = arith.constant 1 : i32
    %52 = arith.addi %0, %c1_i32_30 : i32
    %c0_31 = arith.constant 0 : index
    %53 = arith.index_cast %52 : i32 to index
    %c2_32 = arith.constant 2 : index
    %c0_33 = arith.constant 0 : index
    %54 = vector.load %arg2[%c0_31, %53, %c2_32, %c0_33] : memref<1x18x18x4xf32, #tpu.memory_space<vmem>>, vector<1x8x16x4xf32>
    %55 = vector.shape_cast %54 : vector<1x8x16x4xf32> to vector<8x16x4xf32>
    %c1_34 = arith.constant 1 : index
    %c2_35 = arith.constant 2 : index
    %c0_36 = arith.constant 0 : index
    %56 = vector.load %arg3[%c1_34, %c2_35, %c0_36] : memref<3x3x4xf32, #tpu.memory_space<vmem>>, vector<1x1x4xf32>
    %57 = vector.shape_cast %56 : vector<1x1x4xf32> to vector<4xf32>
    %58 = vector.shape_cast %57 : vector<4xf32> to vector<1x1x4xf32>
    %59 = vector.broadcast %58 : vector<1x1x4xf32> to vector<8x16x4xf32>
    %60 = arith.mulf %55, %59 : vector<8x16x4xf32>
    %61 = arith.addf %51, %60 : vector<8x16x4xf32>
    %c2_i32 = arith.constant 2 : i32
    %62 = arith.addi %0, %c2_i32 : i32
    %c0_37 = arith.constant 0 : index
    %63 = arith.index_cast %62 : i32 to index
    %c0_38 = arith.constant 0 : index
    %c0_39 = arith.constant 0 : index
    %64 = vector.load %arg2[%c0_37, %63, %c0_38, %c0_39] : memref<1x18x18x4xf32, #tpu.memory_space<vmem>>, vector<1x8x16x4xf32>
    %65 = vector.shape_cast %64 : vector<1x8x16x4xf32> to vector<8x16x4xf32>
    %c2_40 = arith.constant 2 : index
    %c0_41 = arith.constant 0 : index
    %c0_42 = arith.constant 0 : index
    %66 = vector.load %arg3[%c2_40, %c0_41, %c0_42] : memref<3x3x4xf32, #tpu.memory_space<vmem>>, vector<1x1x4xf32>
    %67 = vector.shape_cast %66 : vector<1x1x4xf32> to vector<4xf32>
    %68 = vector.shape_cast %67 : vector<4xf32> to vector<1x1x4xf32>
    %69 = vector.broadcast %68 : vector<1x1x4xf32> to vector<8x16x4xf32>
    %70 = arith.mulf %65, %69 : vector<8x16x4xf32>
    %71 = arith.addf %61, %70 : vector<8x16x4xf32>
    %c2_i32_43 = arith.constant 2 : i32
    %72 = arith.addi %0, %c2_i32_43 : i32
    %c0_44 = arith.constant 0 : index
    %73 = arith.index_cast %72 : i32 to index
    %c1_45 = arith.constant 1 : index
    %c0_46 = arith.constant 0 : index
    %74 = vector.load %arg2[%c0_44, %73, %c1_45, %c0_46] : memref<1x18x18x4xf32, #tpu.memory_space<vmem>>, vector<1x8x16x4xf32>
    %75 = vector.shape_cast %74 : vector<1x8x16x4xf32> to vector<8x16x4xf32>
    %c2_47 = arith.constant 2 : index
    %c1_48 = arith.constant 1 : index
    %c0_49 = arith.constant 0 : index
    %76 = vector.load %arg3[%c2_47, %c1_48, %c0_49] : memref<3x3x4xf32, #tpu.memory_space<vmem>>, vector<1x1x4xf32>
    %77 = vector.shape_cast %76 : vector<1x1x4xf32> to vector<4xf32>
    %78 = vector.shape_cast %77 : vector<4xf32> to vector<1x1x4xf32>
    %79 = vector.broadcast %78 : vector<1x1x4xf32> to vector<8x16x4xf32>
    %80 = arith.mulf %75, %79 : vector<8x16x4xf32>
    %81 = arith.addf %71, %80 : vector<8x16x4xf32>
    %c2_i32_50 = arith.constant 2 : i32
    %82 = arith.addi %0, %c2_i32_50 : i32
    %c0_51 = arith.constant 0 : index
    %83 = arith.index_cast %82 : i32 to index
    %c2_52 = arith.constant 2 : index
    %c0_53 = arith.constant 0 : index
    %84 = vector.load %arg2[%c0_51, %83, %c2_52, %c0_53] : memref<1x18x18x4xf32, #tpu.memory_space<vmem>>, vector<1x8x16x4xf32>
    %85 = vector.shape_cast %84 : vector<1x8x16x4xf32> to vector<8x16x4xf32>
    %c2_54 = arith.constant 2 : index
    %c2_55 = arith.constant 2 : index
    %c0_56 = arith.constant 0 : index
    %86 = vector.load %arg3[%c2_54, %c2_55, %c0_56] : memref<3x3x4xf32, #tpu.memory_space<vmem>>, vector<1x1x4xf32>
    %87 = vector.shape_cast %86 : vector<1x1x4xf32> to vector<4xf32>
    %88 = vector.shape_cast %87 : vector<4xf32> to vector<1x1x4xf32>
    %89 = vector.broadcast %88 : vector<1x1x4xf32> to vector<8x16x4xf32>
    %90 = arith.mulf %85, %89 : vector<8x16x4xf32>
    %91 = arith.addf %81, %90 : vector<8x16x4xf32>
    %c0_57 = arith.constant 0 : index
    %c0_58 = arith.constant 0 : index
    %92 = vector.load %arg4[%c0_57, %c0_58] : memref<1x4xf32, #tpu.memory_space<vmem>>, vector<1x4xf32>
    %93 = vector.shape_cast %92 : vector<1x4xf32> to vector<4xf32>
    %94 = vector.shape_cast %93 : vector<4xf32> to vector<1x1x4xf32>
    %95 = vector.broadcast %94 : vector<1x1x4xf32> to vector<8x16x4xf32>
    %96 = arith.addf %91, %95 : vector<8x16x4xf32>
    %97 = vector.shape_cast %96 : vector<8x16x4xf32> to vector<128x4xf32>
    %c0_59 = arith.constant 0 : index
    %c0_60 = arith.constant 0 : index
    %98 = vector.load %arg5[%c0_59, %c0_60] : memref<4x4xf32, #tpu.memory_space<vmem>>, vector<4x4xf32>
    %cst_61 = arith.constant dense<0.000000e+00> : vector<128x4xf32>
    %99 = tpu.matmul %97, %98, %cst_61 {dimension_numbers = #tpu.dot_dimension_numbers<[1], [0], [0], [1], [0, 0, 1, 1], [], []>} : vector<128x4xf32>, vector<4x4xf32>, vector<128x4xf32> -> vector<128x4xf32>
    %c0_62 = arith.constant 0 : index
    %c0_63 = arith.constant 0 : index
    %100 = vector.load %arg6[%c0_62, %c0_63] : memref<1x4xf32, #tpu.memory_space<vmem>>, vector<1x4xf32>
    %101 = vector.broadcast %100 : vector<1x4xf32> to vector<128x4xf32>
    %102 = arith.addf %99, %101 : vector<128x4xf32>
    %c1_i32_64 = arith.constant 1 : i32
    %103 = arith.addi %0, %c1_i32_64 : i32
    %c0_65 = arith.constant 0 : index
    %104 = arith.index_cast %103 : i32 to index
    %c1_66 = arith.constant 1 : index
    %c0_67 = arith.constant 0 : index
    %105 = vector.load %arg2[%c0_65, %104, %c1_66, %c0_67] : memref<1x18x18x4xf32, #tpu.memory_space<vmem>>, vector<1x8x16x4xf32>
    %106 = vector.shape_cast %105 : vector<1x8x16x4xf32> to vector<8x16x4xf32>
    %107 = vector.shape_cast %106 : vector<8x16x4xf32> to vector<128x4xf32>
    %108 = arith.addf %102, %107 : vector<128x4xf32>
    %cst_68 = arith.constant 0.000000e+00 : f32
    %109 = vector.broadcast %cst_68 : f32 to vector<128x4xf32>
    %110 = arith.maximumf %108, %109 : vector<128x4xf32>
    %111 = vector.shape_cast %110 : vector<128x4xf32> to vector<1x8x16x4xf32>
    %c0_69 = arith.constant 0 : index
    %c0_70 = arith.constant 0 : index
    %c0_71 = arith.constant 0 : index
    %c0_72 = arith.constant 0 : index
    %112 = vector.load %arg7[%c0_69, %c0_70, %c0_71, %c0_72] : memref<1x8x16x4xf32, #tpu.memory_space<vmem>>, vector<1x8x16x4xf32>
    tpu.vector_store %arg7[%c0_69, %c0_70, %c0_71, %c0_72], %111 {strides = array<i32>} : memref<1x8x16x4xf32, #tpu.memory_space<vmem>>, vector<1x8x16x4xf32>,
    return
  }
  func.func @transform_0(%arg0: i32, %arg1: i32) -> (i32, i32, i32, i32) {
    %c0_i32 = arith.constant 0 : i32
    %c0_i32_0 = arith.constant 0 : i32
    %c0_i32_1 = arith.constant 0 : i32
    %c0_i32_2 = arith.constant 0 : i32
    return %arg0, %c0_i32, %c0_i32_0, %c0_i32_1 : i32, i32, i32, i32
  }
  func.func @transform_1(%arg0: i32, %arg1: i32) -> (i32, i32, i32) {
    %c0_i32 = arith.constant 0 : i32
    %c0_i32_0 = arith.constant 0 : i32
    %c0_i32_1 = arith.constant 0 : i32
    %c0_i32_2 = arith.constant 0 : i32
    return %c0_i32, %c0_i32_0, %c0_i32_1 : i32, i32, i32
  }
  func.func @transform_2(%arg0: i32, %arg1: i32) -> (i32, i32) {
    %c0_i32 = arith.constant 0 : i32
    %c0_i32_0 = arith.constant 0 : i32
    %c0_i32_1 = arith.constant 0 : i32
    return %c0_i32, %c0_i32_0 : i32, i32
  }
  func.func @transform_3(%arg0: i32, %arg1: i32) -> (i32, i32) {
    %c0_i32 = arith.constant 0 : i32
    %c0_i32_0 = arith.constant 0 : i32
    %c0_i32_1 = arith.constant 0 : i32
    return %c0_i32, %c0_i32_0 : i32, i32
  }
  func.func @transform_4(%arg0: i32, %arg1: i32) -> (i32, i32) {
    %c0_i32 = arith.constant 0 : i32
    %c0_i32_0 = arith.constant 0 : i32
    %c0_i32_1 = arith.constant 0 : i32
    return %c0_i32, %c0_i32_0 : i32, i32
  }
  func.func @transform_5(%arg0: i32, %arg1: i32) -> (i32, i32, i32, i32) {
    %c0_i32 = arith.constant 0 : i32
    %c0_i32_0 = arith.constant 0 : i32
    %c0_i32_1 = arith.constant 0 : i32
    return %arg0, %arg1, %c0_i32, %c0_i32_0 : i32, i32, i32, i32
  }
}

</mosaic_0001>

<llo_original>
// kernel: tpu_custom_call.1
$region0: #{tpu_custom_call.1}
  #allocation0 [shape = 'u32[]', space=smem, size = 0x4, offset = 0x4, fixed_abs, tag = 'smem constant byte address 0x4 - core index']
  #allocation1 [shape = 'u32[72,128]{1,0:T(1,128)}', space=vmem, size = 0x9000, scoped, tag = 'internal scratch']
  %s0 = inlined_call_operand.vmem [shape: f32[2,18,18,4], index: 0, kind: input, shape index: {}]
  %s1 = inlined_call_operand.vmem [shape: f32[3,3,4], index: 1, kind: input, shape index: {}]
  %s2 = inlined_call_operand.vmem [shape: f32[1,4], index: 2, kind: input, shape index: {}]
  %s3 = inlined_call_operand.vmem [shape: f32[4,4], index: 3, kind: input, shape index: {}]
  %s4 = inlined_call_operand.vmem [shape: f32[1,4], index: 4, kind: input, shape index: {}]
  %s5 = inlined_call_operand.vmem [shape: f32[2,16,16,4], index: 5, kind: output, shape index: {}]
  %s6 = sld [smem:[#allocation0]]
  $region53: #{tpu_custom_call.1} parent=0
    _
  %s8 = ssub.s32 1, %s6
  %s9 = scalar_select 0, %s8, %s6
  loop: start=0, step=1, limit=6
  $region2: #{tpu_custom_call.1} parent=0 // loop_pre_header
    _
  $region3: #{tpu_custom_call.1} parent=0 // loop_header
    %s11 = sphi 0, %s15
    %p12 = scmp.ge.s32.totalorder %s11, 6
    %s18 = sphi 0, %s30
    %s19 = sphi 0, %s26
    %s20 = sphi 0, %s18
    %s21 = sphi 0, %s19
    %s22 = sphi 0, %s20
    %s23 = sphi 0, %s21
    %s33 = sphi 0, %s35
    %s36 = sphi 0, %s33
    %s37 = sphi 0, %s36
    %s53 = sphi 0, %s37
    %s57 = sphi 0, %s57
    %s59 = sphi 0, %s57
    %s60 = sphi 0, %s59
    %s74 = sphi 0, %s60
    %s78 = sphi 0, %s78
    %s80 = sphi 0, %s78
    %s81 = sphi 0, %s80
    %s95 = sphi 0, %s81
    %s99 = sphi 0, %s99
    %s101 = sphi 0, %s99
    %s102 = sphi 0, %s101
    %s116 = sphi 0, %s102
    %s120 = sphi 0, %s120
    %s122 = sphi 0, %s120
    %s123 = sphi 0, %s122
    %s137 = sphi 0, %s123
    %s145 = sphi 0, %s147
    %s148 = sphi 0, %s145
    %s149 = sphi 0, %s148
    %s165 = sphi 0, %s149
  $region4: #{tpu_custom_call.1} parent=0 // loop_header_branch
    %14 = sbr.rel (%p12) target = $region8
  $region5: #{tpu_custom_call.1} parent=0 // loop_body
    %s16 = ssub.s32 %s11, 1
    %s17 = ssub.s32 %s11, 2
    %s24 = sadd.s32 1, %s19
    %p25 = scmp.ge.s32.totalorder %s24, 2
    %s26 = scalar_select %p25, 0, %s24
    %s27 = sadd.s32 1, %s18
    %s28 = scalar_select %p25, %s27, %s18
    %p29 = scmp.ge.s32.totalorder %s28, 2
    %s30 = scalar_select %p29, 0, %s28
    %s31 = ssub.s32 %s18, %s30
    %p32 = scmp.eq.s32.totalorder %s31, 0
    %s34 = sadd.s32 %s33, 1
    %s35 = scalar_select %p32, %s33, %s34
    %p38 = pneg %p32
    %p39 = scmp.eq.s32.totalorder %s11, 3
    %p40 = por %p38, %p39
    %p41 = scmp.ne.s32.totalorder %s33, %s36
    %p42 = scmp.eq.s32.totalorder %s11, 0
    %p43 = por %p41, %p42
    %p44 = scmp.ne.s32.totalorder %s33, %s36
    %p45 = scmp.eq.s32.totalorder %s16, 3
    %p46 = por %p44, %p45
    %p47 = scmp.ne.s32.totalorder %s36, %s37
    %p48 = scmp.eq.s32.totalorder %s16, 0
    %p49 = por %p47, %p48
    %p50 = scmp.ne.s32.totalorder %s36, %s37
    %p51 = scmp.eq.s32.totalorder %s17, 3
    %p52 = por %p50, %p51
    %p54 = scmp.ne.s32.totalorder %s37, %s53
    %p55 = scmp.eq.s32.totalorder %s17, 0
    %p56 = por %p54, %p55
    %s58 = sadd.s32 %s57, 1
    %p61 = scmp.eq.s32.totalorder %s11, 3
    %p62 = scmp.ne.s32.totalorder %s57, %s59
    %p63 = scmp.eq.s32.totalorder %s11, 0
    %p64 = por %p62, %p63
    %p65 = scmp.ne.s32.totalorder %s57, %s59
    %p66 = scmp.eq.s32.totalorder %s16, 3
    %p67 = por %p65, %p66
    %p68 = scmp.ne.s32.totalorder %s59, %s60
    %p69 = scmp.eq.s32.totalorder %s16, 0
    %p70 = por %p68, %p69
    %p71 = scmp.ne.s32.totalorder %s59, %s60
    %p72 = scmp.eq.s32.totalorder %s17, 3
    %p73 = por %p71, %p72
    %p75 = scmp.ne.s32.totalorder %s60, %s74
    %p76 = scmp.eq.s32.totalorder %s17, 0
    %p77 = por %p75, %p76
    %s79 = sadd.s32 %s78, 1
    %p82 = scmp.eq.s32.totalorder %s11, 3
    %p83 = scmp.ne.s32.totalorder %s78, %s80
    %p84 = scmp.eq.s32.totalorder %s11, 0
    %p85 = por %p83, %p84
    %p86 = scmp.ne.s32.totalorder %s78, %s80
    %p87 = scmp.eq.s32.totalorder %s16, 3
    %p88 = por %p86, %p87
    %p89 = scmp.ne.s32.totalorder %s80, %s81
    %p90 = scmp.eq.s32.totalorder %s16, 0
    %p91 = por %p89, %p90
    %p92 = scmp.ne.s32.totalorder %s80, %s81
    %p93 = scmp.eq.s32.totalorder %s17, 3
    %p94 = por %p92, %p93
    %p96 = scmp.ne.s32.totalorder %s81, %s95
    %p97 = scmp.eq.s32.totalorder %s17, 0
    %p98 = por %p96, %p97
    %s100 = sadd.s32 %s99, 1
    %p103 = scmp.eq.s32.totalorder %s11, 3
    %p104 = scmp.ne.s32.totalorder %s99, %s101
    %p105 = scmp.eq.s32.totalorder %s11, 0
    %p106 = por %p104, %p105
    %p107 = scmp.ne.s32.totalorder %s99, %s101
    %p108 = scmp.eq.s32.totalorder %s16, 3
    %p109 = por %p107, %p108
    %p110 = scmp.ne.s32.totalorder %s101, %s102
    %p111 = scmp.eq.s32.totalorder %s16, 0
    %p112 = por %p110, %p111
    %p113 = scmp.ne.s32.totalorder %s101, %s102
    %p114 = scmp.eq.s32.totalorder %s17, 3
    %p115 = por %p113, %p114
    %p117 = scmp.ne.s32.totalorder %s102, %s116
    %p118 = scmp.eq.s32.totalorder %s17, 0
    %p119 = por %p117, %p118
    %s121 = sadd.s32 %s120, 1
    %p124 = scmp.eq.s32.totalorder %s11, 3
    %p125 = scmp.ne.s32.totalorder %s120, %s122
    %p126 = scmp.eq.s32.totalorder %s11, 0
    %p127 = por %p125, %p126
    %p128 = scmp.ne.s32.totalorder %s120, %s122
    %p129 = scmp.eq.s32.totalorder %s16, 3
    %p130 = por %p128, %p129
    %p131 = scmp.ne.s32.totalorder %s122, %s123
    %p132 = scmp.eq.s32.totalorder %s16, 0
    %p133 = por %p131, %p132
    %p134 = scmp.ne.s32.totalorder %s122, %s123
    %p135 = scmp.eq.s32.totalorder %s17, 3
    %p136 = por %p134, %p135
    %p138 = scmp.ne.s32.totalorder %s123, %s137
    %p139 = scmp.eq.s32.totalorder %s17, 0
    %p140 = por %p138, %p139
    %s141 = ssub.s32 %s18, %s30
    %s142 = ssub.s32 %s19, %s26
    %s143 = sor.u32 %s141, %s142
    %p144 = scmp.eq.s32.totalorder %s143, 0
    %s146 = sadd.s32 %s145, 1
    %s147 = scalar_select %p144, %s145, %s146
    %p150 = pneg %p144
    %p151 = scmp.eq.s32.totalorder %s11, 3
    %p152 = por %p150, %p151
    %p153 = scmp.ne.s32.totalorder %s145, %s148
    %p154 = scmp.eq.s32.totalorder %s11, 0
    %p155 = por %p153, %p154
    %p156 = scmp.ne.s32.totalorder %s145, %s148
    %p157 = scmp.eq.s32.totalorder %s16, 3
    %p158 = por %p156, %p157
    %p159 = scmp.ne.s32.totalorder %s148, %s149
    %p160 = scmp.eq.s32.totalorder %s16, 0
    %p161 = por %p159, %p160
    %p162 = scmp.ne.s32.totalorder %s148, %s149
    %p163 = scmp.eq.s32.totalorder %s17, 3
    %p164 = por %p162, %p163
    %p166 = scmp.ne.s32.totalorder %s149, %s165
    %p167 = scmp.eq.s32.totalorder %s17, 0
    %p168 = por %p166, %p167
    %p169 = scmp.le.s32.totalorder 1, %s11
    %p170 = scmp.lt.s32.totalorder %s11, 5
    %p171 = pnand %p169, %p170
    %p172 = pneg %p171
    // Predicated region
    $region9: #{tpu_custom_call.1} parent=5 // pred_check
      _
    $region10: #{tpu_custom_call.1} parent=5 // pred_check_branch
      %174 = sbr.rel (%p171) target = $region12
    $region11: #{tpu_custom_call.1} parent=5 // pred_region
      %s175 = ssub.s32 %s11, 1
      // Predicated region
      $region13: #{tpu_custom_call.1} parent=11 // pred_check
        %p176 = pneg %p70
      $region14: #{tpu_custom_call.1} parent=11 // pred_check_branch
        %178 = sbr.rel (%p176) target = $region16
      $region15: #{tpu_custom_call.1} parent=11 // pred_region
        _
      $region16: #{tpu_custom_call.1} parent=11 // pred_fallthru
        _
      // Predicated region
      $region17: #{tpu_custom_call.1} parent=11 // pred_check
        %p179 = pneg %p91
      $region18: #{tpu_custom_call.1} parent=11 // pred_check_branch
        %181 = sbr.rel (%p179) target = $region20
      $region19: #{tpu_custom_call.1} parent=11 // pred_region
        _
      $region20: #{tpu_custom_call.1} parent=11 // pred_fallthru
        _
      // Predicated region
      $region21: #{tpu_custom_call.1} parent=11 // pred_check
        %p182 = pneg %p112
      $region22: #{tpu_custom_call.1} parent=11 // pred_check_branch
        %184 = sbr.rel (%p182) target = $region24
      $region23: #{tpu_custom_call.1} parent=11 // pred_region
        _
      $region24: #{tpu_custom_call.1} parent=11 // pred_fallthru
        _
      // Predicated region
      $region25: #{tpu_custom_call.1} parent=11 // pred_check
        %p185 = pneg %p133
      $region26: #{tpu_custom_call.1} parent=11 // pred_check_branch
        %187 = sbr.rel (%p185) target = $region28
      $region27: #{tpu_custom_call.1} parent=11 // pred_region
        _
      $region28: #{tpu_custom_call.1} parent=11 // pred_fallthru
        _
    $region12: #{tpu_custom_call.1} parent=5 // pred_fallthru
      _
    %p188 = scmp.lt.s32.totalorder %s11, 4
    // Predicated region
    $region29: #{tpu_custom_call.1} parent=5 // pred_check
      %p189 = pneg %p188
    $region30: #{tpu_custom_call.1} parent=5 // pred_check_branch
      %191 = sbr.rel (%p189) target = $region32
    $region31: #{tpu_custom_call.1} parent=5 // pred_region
      // Predicated region
      $region33: #{tpu_custom_call.1} parent=31 // pred_check
        %p192 = pneg %p43
      $region34: #{tpu_custom_call.1} parent=31 // pred_check_branch
        %194 = sbr.rel (%p192) target = $region36
      $region35: #{tpu_custom_call.1} parent=31 // pred_region
        %p195 = scmp.lt.s32.totalorder %s18, 1
        %s196 = scalar_select %p195, %s18, 1
        %s197 = smul.addr %s196, 54
        %s198 = smul.addr %s197, 8
        %s199 = scalar_lea.vmem %s0, %s198
      $region36: #{tpu_custom_call.1} parent=31 // pred_fallthru
        _
    $region32: #{tpu_custom_call.1} parent=5 // pred_fallthru
      _
    %p200 = scmp.le.s32.totalorder 1, %s11
    %p201 = scmp.lt.s32.totalorder %s11, 5
    %p202 = pnand %p200, %p201
    %p203 = pneg %p202
    // Predicated region
    $region37: #{tpu_custom_call.1} parent=5 // pred_check
      _
    $region38: #{tpu_custom_call.1} parent=5 // pred_check_branch
      %205 = sbr.rel (%p202) target = $region40
    $region39: #{tpu_custom_call.1} parent=5 // pred_region
      %s206 = ssub.s32 %s11, 1
      %p207 = scmp.lt.s32.totalorder %s20, 1
      %s208 = scalar_select %p207, %s20, 1
      %s209 = smul.addr %s208, 54
      %s210 = smul.addr %s209, 8
      %s211 = scalar_lea.vmem %s0, %s210
      %p212 = pneg %p49
      %p213 = pneg %p46
      %p214 = pneg %p70
      %p215 = pneg %p67
      %p216 = pneg %p91
      %p217 = pneg %p88
      %p218 = pneg %p112
      %p219 = pneg %p109
      %p220 = pneg %p133
      %p221 = pneg %p130
      %p222 = pneg %p161
      %p223 = pneg %p158
      %s224 = smul.u32 8, %s21
      %p225 = scmp.lt.s32.totalorder %s20, 1
      %s226 = scalar_select %p225, %s20, 1
      %p227 = scmp.lt.s32.totalorder %s224, 15
      %s228 = scalar_select %p227, %s224, 15
      %s229 = smul.addr %s228, 2
      %s230 = smul.addr %s226, 32
      %s231 = sadd.s32 %s229, %s230
      %s232 = smul.addr %s231, 8
      %s233 = scalar_lea.vmem %s5, %s232
      %p234 = scmp.lt.s32.totalorder %s20, 1
      %s235 = scalar_select %p234, %s20, 1
      %s236 = smul.addr %s235, 54
      %s237 = smul.addr %s236, 8
      %s238 = scalar_lea.vmem %s0, %s237
      %s239 = smul.u32 8, %s21
      %p240 = scmp.lt.s32.totalorder %s20, 1
      %s241 = scalar_select %p240, %s20, 1
      %p242 = scmp.lt.s32.totalorder %s239, 15
      %s243 = scalar_select %p242, %s239, 15
      %s244 = smul.addr %s243, 2
      %s245 = smul.addr %s241, 32
      %s246 = sadd.s32 %s244, %s245
      %s247 = smul.addr %s246, 8
      %s248 = scalar_lea.vmem %s5, %s247
      %s249 = smul.u32 8, %s21
      %s250 = smul.u32 %s21, 8
      %s251 = smul.u32 %s250, 24
      %s252 = scalar_lea.vmem %s238, %s251
      %v253 = vld [vmem:[%s252] sm:$0xff]
      %v254 = vld [vmem:[%s252 + $0x8] sm:$0xff]
      %v255 = vld [vmem:[%s252 + $0x18] sm:$0xff]
      %v256 = vld [vmem:[%s252 + $0x20] sm:$0xff]
      %v257 = vld [vmem:[%s252 + $0x30] sm:$0xff]
      %v258 = vld [vmem:[%s252 + $0x38] sm:$0xff]
      %v259 = vld [vmem:[%s252 + $0x48] sm:$0xff]
      %v260 = vld [vmem:[%s252 + $0x50] sm:$0xff]
      %v261 = vld [vmem:[%s252 + $0x60] sm:$0xff]
      %v262 = vld [vmem:[%s252 + $0x68] sm:$0xff]
      %v263 = vld [vmem:[%s252 + $0x78] sm:$0xff]
      %v264 = vld [vmem:[%s252 + $0x80] sm:$0xff]
      %v265 = vld [vmem:[%s252 + $0x90] sm:$0xff]
      %v266 = vld [vmem:[%s252 + $0x98] sm:$0xff]
      %v267 = vld [vmem:[%s252 + $0xa8] sm:$0xff]
      %v268 = vld [vmem:[%s252 + $0xb0] sm:$0xff]
      %v269 = vld [vmem:[%s1] sm:$0x1]
      %v270 = vperm.slane %v269, 0
      %v271 = vmul.f32 %v253, %v270
      %v272 = vmul.f32 %v254, %v270
      %v273 = vmul.f32 %v255, %v270
      %v274 = vmul.f32 %v256, %v270
      %v275 = vmul.f32 %v257, %v270
      %v276 = vmul.f32 %v258, %v270
      %v277 = vmul.f32 %v259, %v270
      %v278 = vmul.f32 %v260, %v270
      %v279 = vmul.f32 %v261, %v270
      %v280 = vmul.f32 %v262, %v270
      %v281 = vmul.f32 %v263, %v270
      %v282 = vmul.f32 %v264, %v270
      %v283 = vmul.f32 %v265, %v270
      %v284 = vmul.f32 %v266, %v270
      %v285 = vmul.f32 %v267, %v270
      %v286 = vmul.f32 %v268, %v270
      %v287 = vadd.f32 %v271, 0.0
      %v288 = vadd.f32 %v272, 0.0
      %v289 = vadd.f32 %v273, 0.0
      %v290 = vadd.f32 %v274, 0.0
      %v291 = vadd.f32 %v275, 0.0
      %v292 = vadd.f32 %v276, 0.0
      %v293 = vadd.f32 %v277, 0.0
      %v294 = vadd.f32 %v278, 0.0
      %v295 = vadd.f32 %v279, 0.0
      %v296 = vadd.f32 %v280, 0.0
      %v297 = vadd.f32 %v281, 0.0
      %v298 = vadd.f32 %v282, 0.0
      %v299 = vadd.f32 %v283, 0.0
      %v300 = vadd.f32 %v284, 0.0
      %v301 = vadd.f32 %v285, 0.0
      %v302 = vadd.f32 %v286, 0.0
      %v303 = vld [vmem:[%s252 + $0x1] sm:$0xff]
      %v304 = vld [vmem:[%s252 + $0x9] sm:$0xff]
      %v305 = vld [vmem:[%s252 + $0x19] sm:$0xff]
      %v306 = vld [vmem:[%s252 + $0x21] sm:$0xff]
      %v307 = vld [vmem:[%s252 + $0x31] sm:$0xff]
      %v308 = vld [vmem:[%s252 + $0x39] sm:$0xff]
      %v309 = vld [vmem:[%s252 + $0x49] sm:$0xff]
      %v310 = vld [vmem:[%s252 + $0x51] sm:$0xff]
      %v311 = vld [vmem:[%s252 + $0x61] sm:$0xff]
      %v312 = vld [vmem:[%s252 + $0x69] sm:$0xff]
      %v313 = vld [vmem:[%s252 + $0x79] sm:$0xff]
      %v314 = vld [vmem:[%s252 + $0x81] sm:$0xff]
      %v315 = vld [vmem:[%s252 + $0x91] sm:$0xff]
      %v316 = vld [vmem:[%s252 + $0x99] sm:$0xff]
      %v317 = vld [vmem:[%s252 + $0xa9] sm:$0xff]
      %v318 = vld [vmem:[%s252 + $0xb1] sm:$0xff]
      %v319 = vld [vmem:[%s1 + $0x1] sm:$0x1]
      %v320 = vperm.slane %v319, 0
      %v321 = vmul.f32 %v303, %v320
      %v322 = vmul.f32 %v304, %v320
      %v323 = vmul.f32 %v305, %v320
      %v324 = vmul.f32 %v306, %v320
      %v325 = vmul.f32 %v307, %v320
      %v326 = vmul.f32 %v308, %v320
      %v327 = vmul.f32 %v309, %v320
      %v328 = vmul.f32 %v310, %v320
      %v329 = vmul.f32 %v311, %v320
      %v330 = vmul.f32 %v312, %v320
      %v331 = vmul.f32 %v313, %v320
      %v332 = vmul.f32 %v314, %v320
      %v333 = vmul.f32 %v315, %v320
      %v334 = vmul.f32 %v316, %v320
      %v335 = vmul.f32 %v317, %v320
      %v336 = vmul.f32 %v318, %v320
      %v337 = vadd.f32 %v287, %v321
      %v338 = vadd.f32 %v288, %v322
      %v339 = vadd.f32 %v289, %v323
      %v340 = vadd.f32 %v290, %v324
      %v341 = vadd.f32 %v291, %v325
      %v342 = vadd.f32 %v292, %v326
      %v343 = vadd.f32 %v293, %v327
      %v344 = vadd.f32 %v294, %v328
      %v345 = vadd.f32 %v295, %v329
      %v346 = vadd.f32 %v296, %v330
      %v347 = vadd.f32 %v297, %v331
      %v348 = vadd.f32 %v298, %v332
      %v349 = vadd.f32 %v299, %v333
      %v350 = vadd.f32 %v300, %v334
      %v351 = vadd.f32 %v301, %v335
      %v352 = vadd.f32 %v302, %v336
      %v353 = vld [vmem:[%s252 + $0x2] sm:$0xff]
      %v354 = vld [vmem:[%s252 + $0xa] sm:$0xff]
      %v355 = vld [vmem:[%s252 + $0x1a] sm:$0xff]
      %v356 = vld [vmem:[%s252 + $0x22] sm:$0xff]
      %v357 = vld [vmem:[%s252 + $0x32] sm:$0xff]
      %v358 = vld [vmem:[%s252 + $0x3a] sm:$0xff]
      %v359 = vld [vmem:[%s252 + $0x4a] sm:$0xff]
      %v360 = vld [vmem:[%s252 + $0x52] sm:$0xff]
      %v361 = vld [vmem:[%s252 + $0x62] sm:$0xff]
      %v362 = vld [vmem:[%s252 + $0x6a] sm:$0xff]
      %v363 = vld [vmem:[%s252 + $0x7a] sm:$0xff]
      %v364 = vld [vmem:[%s252 + $0x82] sm:$0xff]
      %v365 = vld [vmem:[%s252 + $0x92] sm:$0xff]
      %v366 = vld [vmem:[%s252 + $0x9a] sm:$0xff]
      %v367 = vld [vmem:[%s252 + $0xaa] sm:$0xff]
      %v368 = vld [vmem:[%s252 + $0xb2] sm:$0xff]
      %v369 = vld [vmem:[%s1 + $0x2] sm:$0x1]
      %v370 = vperm.slane %v369, 0
      %v371 = vmul.f32 %v353, %v370
      %v372 = vmul.f32 %v354, %v370
      %v373 = vmul.f32 %v355, %v370
      %v374 = vmul.f32 %v356, %v370
      %v375 = vmul.f32 %v357, %v370
      %v376 = vmul.f32 %v358, %v370
      %v377 = vmul.f32 %v359, %v370
      %v378 = vmul.f32 %v360, %v370
      %v379 = vmul.f32 %v361, %v370
      %v380 = vmul.f32 %v362, %v370
      %v381 = vmul.f32 %v363, %v370
      %v382 = vmul.f32 %v364, %v370
      %v383 = vmul.f32 %v365, %v370
      %v384 = vmul.f32 %v366, %v370
      %v385 = vmul.f32 %v367, %v370
      %v386 = vmul.f32 %v368, %v370
      %v387 = vadd.f32 %v337, %v371
      %v388 = vadd.f32 %v338, %v372
      %v389 = vadd.f32 %v339, %v373
      %v390 = vadd.f32 %v340, %v374
      %v391 = vadd.f32 %v341, %v375
      %v392 = vadd.f32 %v342, %v376
      %v393 = vadd.f32 %v343, %v377
      %v394 = vadd.f32 %v344, %v378
      %v395 = vadd.f32 %v345, %v379
      %v396 = vadd.f32 %v346, %v380
      %v397 = vadd.f32 %v347, %v381
      %v398 = vadd.f32 %v348, %v382
      %v399 = vadd.f32 %v349, %v383
      %v400 = vadd.f32 %v350, %v384
      %v401 = vadd.f32 %v351, %v385
      %v402 = vadd.f32 %v352, %v386
      %s403 = sadd.s32 %s250, 1
      %s404 = smul.u32 %s403, 24
      %s405 = scalar_lea.vmem %s238, %s404
      %v406 = vld [vmem:[%s405] sm:$0xff]
      %v407 = vld [vmem:[%s405 + $0x8] sm:$0xff]
      %v408 = vld [vmem:[%s405 + $0x18] sm:$0xff]
      %v409 = vld [vmem:[%s405 + $0x20] sm:$0xff]
      %v410 = vld [vmem:[%s405 + $0x30] sm:$0xff]
      %v411 = vld [vmem:[%s405 + $0x38] sm:$0xff]
      %v412 = vld [vmem:[%s405 + $0x48] sm:$0xff]
      %v413 = vld [vmem:[%s405 + $0x50] sm:$0xff]
      %v414 = vld [vmem:[%s405 + $0x60] sm:$0xff]
      %v415 = vld [vmem:[%s405 + $0x68] sm:$0xff]
      %v416 = vld [vmem:[%s405 + $0x78] sm:$0xff]
      %v417 = vld [vmem:[%s405 + $0x80] sm:$0xff]
      %v418 = vld [vmem:[%s405 + $0x90] sm:$0xff]
      %v419 = vld [vmem:[%s405 + $0x98] sm:$0xff]
      %v420 = vld [vmem:[%s405 + $0xa8] sm:$0xff]
      %v421 = vld [vmem:[%s405 + $0xb0] sm:$0xff]
      %s422 = scalar_lea.vmem %s1, 4
      %v423 = vld [vmem:[%s422] sm:$0x1]
      %v424 = vperm.slane %v423, 0
      %v425 = vmul.f32 %v406, %v424
      %v426 = vmul.f32 %v407, %v424
      %v427 = vmul.f32 %v408, %v424
      %v428 = vmul.f32 %v409, %v424
      %v429 = vmul.f32 %v410, %v424
      %v430 = vmul.f32 %v411, %v424
      %v431 = vmul.f32 %v412, %v424
      %v432 = vmul.f32 %v413, %v424
      %v433 = vmul.f32 %v414, %v424
      %v434 = vmul.f32 %v415, %v424
      %v435 = vmul.f32 %v416, %v424
      %v436 = vmul.f32 %v417, %v424
      %v437 = vmul.f32 %v418, %v424
      %v438 = vmul.f32 %v419, %v424
      %v439 = vmul.f32 %v420, %v424
      %v440 = vmul.f32 %v421, %v424
      %v441 = vadd.f32 %v387, %v425
      %v442 = vadd.f32 %v388, %v426
      %v443 = vadd.f32 %v389, %v427
      %v444 = vadd.f32 %v390, %v428
      %v445 = vadd.f32 %v391, %v429
      %v446 = vadd.f32 %v392, %v430
      %v447 = vadd.f32 %v393, %v431
      %v448 = vadd.f32 %v394, %v432
      %v449 = vadd.f32 %v395, %v433
      %v450 = vadd.f32 %v396, %v434
      %v451 = vadd.f32 %v397, %v435
      %v452 = vadd.f32 %v398, %v436
      %v453 = vadd.f32 %v399, %v437
      %v454 = vadd.f32 %v400, %v438
      %v455 = vadd.f32 %v401, %v439
      %v456 = vadd.f32 %v402, %v440
      %v457 = vld [vmem:[%s405 + $0x1] sm:$0xff]
      %v458 = vld [vmem:[%s405 + $0x9] sm:$0xff]
      %v459 = vld [vmem:[%s405 + $0x19] sm:$0xff]
      %v460 = vld [vmem:[%s405 + $0x21] sm:$0xff]
      %v461 = vld [vmem:[%s405 + $0x31] sm:$0xff]
      %v462 = vld [vmem:[%s405 + $0x39] sm:$0xff]
      %v463 = vld [vmem:[%s405 + $0x49] sm:$0xff]
      %v464 = vld [vmem:[%s405 + $0x51] sm:$0xff]
      %v465 = vld [vmem:[%s405 + $0x61] sm:$0xff]
      %v466 = vld [vmem:[%s405 + $0x69] sm:$0xff]
      %v467 = vld [vmem:[%s405 + $0x79] sm:$0xff]
      %v468 = vld [vmem:[%s405 + $0x81] sm:$0xff]
      %v469 = vld [vmem:[%s405 + $0x91] sm:$0xff]
      %v470 = vld [vmem:[%s405 + $0x99] sm:$0xff]
      %v471 = vld [vmem:[%s405 + $0xa9] sm:$0xff]
      %v472 = vld [vmem:[%s405 + $0xb1] sm:$0xff]
      %v473 = vld [vmem:[%s422 + $0x1] sm:$0x1]
      %v474 = vperm.slane %v473, 0
      %v475 = vmul.f32 %v457, %v474
      %v476 = vmul.f32 %v458, %v474
      %v477 = vmul.f32 %v459, %v474
      %v478 = vmul.f32 %v460, %v474
      %v479 = vmul.f32 %v461, %v474
      %v480 = vmul.f32 %v462, %v474
      %v481 = vmul.f32 %v463, %v474
      %v482 = vmul.f32 %v464, %v474
      %v483 = vmul.f32 %v465, %v474
      %v484 = vmul.f32 %v466, %v474
      %v485 = vmul.f32 %v467, %v474
      %v486 = vmul.f32 %v468, %v474
      %v487 = vmul.f32 %v469, %v474
      %v488 = vmul.f32 %v470, %v474
      %v489 = vmul.f32 %v471, %v474
      %v490 = vmul.f32 %v472, %v474
      %v491 = vadd.f32 %v441, %v475
      %v492 = vadd.f32 %v442, %v476
      %v493 = vadd.f32 %v443, %v477
      %v494 = vadd.f32 %v444, %v478
      %v495 = vadd.f32 %v445, %v479
      %v496 = vadd.f32 %v446, %v480
      %v497 = vadd.f32 %v447, %v481
      %v498 = vadd.f32 %v448, %v482
      %v499 = vadd.f32 %v449, %v483
      %v500 = vadd.f32 %v450, %v484
      %v501 = vadd.f32 %v451, %v485
      %v502 = vadd.f32 %v452, %v486
      %v503 = vadd.f32 %v453, %v487
      %v504 = vadd.f32 %v454, %v488
      %v505 = vadd.f32 %v455, %v489
      %v506 = vadd.f32 %v456, %v490
      %v507 = vld [vmem:[%s405 + $0x2] sm:$0xff]
      %v508 = vld [vmem:[%s405 + $0xa] sm:$0xff]
      %v509 = vld [vmem:[%s405 + $0x1a] sm:$0xff]
      %v510 = vld [vmem:[%s405 + $0x22] sm:$0xff]
      %v511 = vld [vmem:[%s405 + $0x32] sm:$0xff]
      %v512 = vld [vmem:[%s405 + $0x3a] sm:$0xff]
      %v513 = vld [vmem:[%s405 + $0x4a] sm:$0xff]
      %v514 = vld [vmem:[%s405 + $0x52] sm:$0xff]
      %v515 = vld [vmem:[%s405 + $0x62] sm:$0xff]
      %v516 = vld [vmem:[%s405 + $0x6a] sm:$0xff]
      %v517 = vld [vmem:[%s405 + $0x7a] sm:$0xff]
      %v518 = vld [vmem:[%s405 + $0x82] sm:$0xff]
      %v519 = vld [vmem:[%s405 + $0x92] sm:$0xff]
      %v520 = vld [vmem:[%s405 + $0x9a] sm:$0xff]
      %v521 = vld [vmem:[%s405 + $0xaa] sm:$0xff]
      %v522 = vld [vmem:[%s405 + $0xb2] sm:$0xff]
      %v523 = vld [vmem:[%s422 + $0x2] sm:$0x1]
      %v524 = vperm.slane %v523, 0
      %v525 = vmul.f32 %v507, %v524
      %v526 = vmul.f32 %v508, %v524
      %v527 = vmul.f32 %v509, %v524
      %v528 = vmul.f32 %v510, %v524
      %v529 = vmul.f32 %v511, %v524
      %v530 = vmul.f32 %v512, %v524
      %v531 = vmul.f32 %v513, %v524
      %v532 = vmul.f32 %v514, %v524
      %v533 = vmul.f32 %v515, %v524
      %v534 = vmul.f32 %v516, %v524
      %v535 = vmul.f32 %v517, %v524
      %v536 = vmul.f32 %v518, %v524
      %v537 = vmul.f32 %v519, %v524
      %v538 = vmul.f32 %v520, %v524
      %v539 = vmul.f32 %v521, %v524
      %v540 = vmul.f32 %v522, %v524
      %v541 = vadd.f32 %v491, %v525
      %v542 = vadd.f32 %v492, %v526
      %v543 = vadd.f32 %v493, %v527
      %v544 = vadd.f32 %v494, %v528
      %v545 = vadd.f32 %v495, %v529
      %v546 = vadd.f32 %v496, %v530
      %v547 = vadd.f32 %v497, %v531
      %v548 = vadd.f32 %v498, %v532
      %v549 = vadd.f32 %v499, %v533
      %v550 = vadd.f32 %v500, %v534
      %v551 = vadd.f32 %v501, %v535
      %v552 = vadd.f32 %v502, %v536
      %v553 = vadd.f32 %v503, %v537
      %v554 = vadd.f32 %v504, %v538
      %v555 = vadd.f32 %v505, %v539
      %v556 = vadd.f32 %v506, %v540
      %s557 = sadd.s32 %s250, 2
      %s558 = smul.u32 %s557, 24
      %s559 = scalar_lea.vmem %s238, %s558
      %v560 = vld [vmem:[%s559] sm:$0xff]
      %v561 = vld [vmem:[%s559 + $0x8] sm:$0xff]
      %v562 = vld [vmem:[%s559 + $0x18] sm:$0xff]
      %v563 = vld [vmem:[%s559 + $0x20] sm:$0xff]
      %v564 = vld [vmem:[%s559 + $0x30] sm:$0xff]
      %v565 = vld [vmem:[%s559 + $0x38] sm:$0xff]
      %v566 = vld [vmem:[%s559 + $0x48] sm:$0xff]
      %v567 = vld [vmem:[%s559 + $0x50] sm:$0xff]
      %v568 = vld [vmem:[%s559 + $0x60] sm:$0xff]
      %v569 = vld [vmem:[%s559 + $0x68] sm:$0xff]
      %v570 = vld [vmem:[%s559 + $0x78] sm:$0xff]
      %v571 = vld [vmem:[%s559 + $0x80] sm:$0xff]
      %v572 = vld [vmem:[%s559 + $0x90] sm:$0xff]
      %v573 = vld [vmem:[%s559 + $0x98] sm:$0xff]
      %v574 = vld [vmem:[%s559 + $0xa8] sm:$0xff]
      %v575 = vld [vmem:[%s559 + $0xb0] sm:$0xff]
      %s576 = scalar_lea.vmem %s1, 8
      %v577 = vld [vmem:[%s576] sm:$0x1]
      %v578 = vperm.slane %v577, 0
      %v579 = vmul.f32 %v560, %v578
      %v580 = vmul.f32 %v561, %v578
      %v581 = vmul.f32 %v562, %v578
      %v582 = vmul.f32 %v563, %v578
      %v583 = vmul.f32 %v564, %v578
      %v584 = vmul.f32 %v565, %v578
      %v585 = vmul.f32 %v566, %v578
      %v586 = vmul.f32 %v567, %v578
      %v587 = vmul.f32 %v568, %v578
      %v588 = vmul.f32 %v569, %v578
      %v589 = vmul.f32 %v570, %v578
      %v590 = vmul.f32 %v571, %v578
      %v591 = vmul.f32 %v572, %v578
      %v592 = vmul.f32 %v573, %v578
      %v593 = vmul.f32 %v574, %v578
      %v594 = vmul.f32 %v575, %v578
      %v595 = vadd.f32 %v541, %v579
      %v596 = vadd.f32 %v542, %v580
      %v597 = vadd.f32 %v543, %v581
      %v598 = vadd.f32 %v544, %v582
      %v599 = vadd.f32 %v545, %v583
      %v600 = vadd.f32 %v546, %v584
      %v601 = vadd.f32 %v547, %v585
      %v602 = vadd.f32 %v548, %v586
      %v603 = vadd.f32 %v549, %v587
      %v604 = vadd.f32 %v550, %v588
      %v605 = vadd.f32 %v551, %v589
      %v606 = vadd.f32 %v552, %v590
      %v607 = vadd.f32 %v553, %v591
      %v608 = vadd.f32 %v554, %v592
      %v609 = vadd.f32 %v555, %v593
      %v610 = vadd.f32 %v556, %v594
      %v611 = vld [vmem:[%s559 + $0x1] sm:$0xff]
      %v612 = vld [vmem:[%s559 + $0x9] sm:$0xff]
      %v613 = vld [vmem:[%s559 + $0x19] sm:$0xff]
      %v614 = vld [vmem:[%s559 + $0x21] sm:$0xff]
      %v615 = vld [vmem:[%s559 + $0x31] sm:$0xff]
      %v616 = vld [vmem:[%s559 + $0x39] sm:$0xff]
      %v617 = vld [vmem:[%s559 + $0x49] sm:$0xff]
      %v618 = vld [vmem:[%s559 + $0x51] sm:$0xff]
      %v619 = vld [vmem:[%s559 + $0x61] sm:$0xff]
      %v620 = vld [vmem:[%s559 + $0x69] sm:$0xff]
      %v621 = vld [vmem:[%s559 + $0x79] sm:$0xff]
      %v622 = vld [vmem:[%s559 + $0x81] sm:$0xff]
      %v623 = vld [vmem:[%s559 + $0x91] sm:$0xff]
      %v624 = vld [vmem:[%s559 + $0x99] sm:$0xff]
      %v625 = vld [vmem:[%s559 + $0xa9] sm:$0xff]
      %v626 = vld [vmem:[%s559 + $0xb1] sm:$0xff]
      %v627 = vld [vmem:[%s576 + $0x1] sm:$0x1]
      %v628 = vperm.slane %v627, 0
      %v629 = vmul.f32 %v611, %v628
      %v630 = vmul.f32 %v612, %v628
      %v631 = vmul.f32 %v613, %v628
      %v632 = vmul.f32 %v614, %v628
      %v633 = vmul.f32 %v615, %v628
      %v634 = vmul.f32 %v616, %v628
      %v635 = vmul.f32 %v617, %v628
      %v636 = vmul.f32 %v618, %v628
      %v637 = vmul.f32 %v619, %v628
      %v638 = vmul.f32 %v620, %v628
      %v639 = vmul.f32 %v621, %v628
      %v640 = vmul.f32 %v622, %v628
      %v641 = vmul.f32 %v623, %v628
      %v642 = vmul.f32 %v624, %v628
      %v643 = vmul.f32 %v625, %v628
      %v644 = vmul.f32 %v626, %v628
      %v645 = vadd.f32 %v595, %v629
      %v646 = vadd.f32 %v596, %v630
      %v647 = vadd.f32 %v597, %v631
      %v648 = vadd.f32 %v598, %v632
      %v649 = vadd.f32 %v599, %v633
      %v650 = vadd.f32 %v600, %v634
      %v651 = vadd.f32 %v601, %v635
      %v652 = vadd.f32 %v602, %v636
      %v653 = vadd.f32 %v603, %v637
      %v654 = vadd.f32 %v604, %v638
      %v655 = vadd.f32 %v605, %v639
      %v656 = vadd.f32 %v606, %v640
      %v657 = vadd.f32 %v607, %v641
      %v658 = vadd.f32 %v608, %v642
      %v659 = vadd.f32 %v609, %v643
      %v660 = vadd.f32 %v610, %v644
      %v661 = vld [vmem:[%s559 + $0x2] sm:$0xff]
      %v662 = vld [vmem:[%s559 + $0xa] sm:$0xff]
      %v663 = vld [vmem:[%s559 + $0x1a] sm:$0xff]
      %v664 = vld [vmem:[%s559 + $0x22] sm:$0xff]
      %v665 = vld [vmem:[%s559 + $0x32] sm:$0xff]
      %v666 = vld [vmem:[%s559 + $0x3a] sm:$0xff]
      %v667 = vld [vmem:[%s559 + $0x4a] sm:$0xff]
      %v668 = vld [vmem:[%s559 + $0x52] sm:$0xff]
      %v669 = vld [vmem:[%s559 + $0x62] sm:$0xff]
      %v670 = vld [vmem:[%s559 + $0x6a] sm:$0xff]
      %v671 = vld [vmem:[%s559 + $0x7a] sm:$0xff]
      %v672 = vld [vmem:[%s559 + $0x82] sm:$0xff]
      %v673 = vld [vmem:[%s559 + $0x92] sm:$0xff]
      %v674 = vld [vmem:[%s559 + $0x9a] sm:$0xff]
      %v675 = vld [vmem:[%s559 + $0xaa] sm:$0xff]
      %v676 = vld [vmem:[%s559 + $0xb2] sm:$0xff]
      %v677 = vld [vmem:[%s576 + $0x2] sm:$0x1]
      %v678 = vperm.slane %v677, 0
      %v679 = vmul.f32 %v661, %v678
      %v680 = vmul.f32 %v662, %v678
      %v681 = vmul.f32 %v663, %v678
      %v682 = vmul.f32 %v664, %v678
      %v683 = vmul.f32 %v665, %v678
      %v684 = vmul.f32 %v666, %v678
      %v685 = vmul.f32 %v667, %v678
      %v686 = vmul.f32 %v668, %v678
      %v687 = vmul.f32 %v669, %v678
      %v688 = vmul.f32 %v670, %v678
      %v689 = vmul.f32 %v671, %v678
      %v690 = vmul.f32 %v672, %v678
      %v691 = vmul.f32 %v673, %v678
      %v692 = vmul.f32 %v674, %v678
      %v693 = vmul.f32 %v675, %v678
      %v694 = vmul.f32 %v676, %v678
      %v695 = vadd.f32 %v645, %v679
      %v696 = vadd.f32 %v646, %v680
      %v697 = vadd.f32 %v647, %v681
      %v698 = vadd.f32 %v648, %v682
      %v699 = vadd.f32 %v649, %v683
      %v700 = vadd.f32 %v650, %v684
      %v701 = vadd.f32 %v651, %v685
      %v702 = vadd.f32 %v652, %v686
      %v703 = vadd.f32 %v653, %v687
      %v704 = vadd.f32 %v654, %v688
      %v705 = vadd.f32 %v655, %v689
      %v706 = vadd.f32 %v656, %v690
      %v707 = vadd.f32 %v657, %v691
      %v708 = vadd.f32 %v658, %v692
      %v709 = vadd.f32 %v659, %v693
      %v710 = vadd.f32 %v660, %v694
      %v711 = vld [vmem:[%s2] sm:$0x1]
      %v713 = vperm.slane %v711, 0
      %v715 = vadd.f32 %v695, %v713
      %v716 = vadd.f32 %v696, %v713
      %v717 = vadd.f32 %v697, %v713
      %v718 = vadd.f32 %v698, %v713
      %v719 = vadd.f32 %v699, %v713
      %v720 = vadd.f32 %v700, %v713
      %v721 = vadd.f32 %v701, %v713
      %v722 = vadd.f32 %v702, %v713
      %v723 = vadd.f32 %v703, %v713
      %v724 = vadd.f32 %v704, %v713
      %v725 = vadd.f32 %v705, %v713
      %v726 = vadd.f32 %v706, %v713
      %v727 = vadd.f32 %v707, %v713
      %v728 = vadd.f32 %v708, %v713
      %v729 = vadd.f32 %v709, %v713
      %v730 = vadd.f32 %v710, %v713
      %v731 = vld [vmem:[%s3] sm:$0xf]
      %v732 = vld [vmem:[%s4] sm:$0x1]
      %v734 = vperm.slane %v732, 0
      %vm736 = vcmask 31744
      %v738 = vsel %vm736, %v715, 0
      %v741 = vsel %vm736, %v716, 0
      %v744 = vsel %vm736, %v717, 0
      %v747 = vsel %vm736, %v718, 0
      %v750 = vsel %vm736, %v719, 0
      %v753 = vsel %vm736, %v720, 0
      %v756 = vsel %vm736, %v721, 0
      %v759 = vsel %vm736, %v722, 0
      %v762 = vsel %vm736, %v723, 0
      %v765 = vsel %vm736, %v724, 0
      %v768 = vsel %vm736, %v725, 0
      %v771 = vsel %vm736, %v726, 0
      %v774 = vsel %vm736, %v727, 0
      %v777 = vsel %vm736, %v728, 0
      %v780 = vsel %vm736, %v729, 0
      %v783 = vsel %vm736, %v730, 0
      %vm785 = vcmask 1043456
      %v787 = vsel %vm785, %v731, 0
      %789 = vmatpush.msra.mxu0 0.0
      %790 = vmatpush.msra.mxu0 0.0
      %791 = vmatpush.msra.mxu0 0.0
      %792 = vmatpush.msra.mxu0 0.0
      %793 = vmatpush.msra.mxu0 0.0
      %794 = vmatpush.msra.mxu0 0.0
      %795 = vmatpush.msra.mxu0 0.0
      %796 = vmatpush.msra.mxu0 0.0
      %797 = vmatpush.msra.mxu0 0.0
      %798 = vmatpush.msra.mxu0 0.0
      %799 = vmatpush.msra.mxu0 0.0
      %800 = vmatpush.msra.mxu0 0.0
      %801 = vmatpush.msra.mxu0 0.0
      %802 = vmatpush.msra.mxu0 0.0
      %803 = vmatpush.msra.mxu0 0.0
      %804 = vmatpush.msra.mxu0 %v787
      %805 = vmatmul.f32.gmra.mxu0 %v738
      %v806 = vpop.f32.mrf.mxu0
      %v807 = vadd.f32 %v734, %v806
      %808 = vmatmul.f32.gmra.mxu0 %v741
      %v809 = vpop.f32.mrf.mxu0
      %v810 = vadd.f32 %v734, %v809
      %811 = vmatmul.f32.gmra.mxu0 %v744
      %v812 = vpop.f32.mrf.mxu0
      %v813 = vadd.f32 %v734, %v812
      %814 = vmatmul.f32.gmra.mxu0 %v747
      %v815 = vpop.f32.mrf.mxu0
      %v816 = vadd.f32 %v734, %v815
      %817 = vmatmul.f32.gmra.mxu0 %v750
      %v818 = vpop.f32.mrf.mxu0
      %v819 = vadd.f32 %v734, %v818
      %820 = vmatmul.f32.gmra.mxu0 %v753
      %v821 = vpop.f32.mrf.mxu0
      %v822 = vadd.f32 %v734, %v821
      %823 = vmatmul.f32.gmra.mxu0 %v756
      %v824 = vpop.f32.mrf.mxu0
      %v825 = vadd.f32 %v734, %v824
      %826 = vmatmul.f32.gmra.mxu0 %v759
      %v827 = vpop.f32.mrf.mxu0
      %v828 = vadd.f32 %v734, %v827
      %829 = vmatmul.f32.gmra.mxu0 %v762
      %v830 = vpop.f32.mrf.mxu0
      %v831 = vadd.f32 %v734, %v830
      %832 = vmatmul.f32.gmra.mxu0 %v765
      %v833 = vpop.f32.mrf.mxu0
      %v834 = vadd.f32 %v734, %v833
      %835 = vmatmul.f32.gmra.mxu0 %v768
      %v836 = vpop.f32.mrf.mxu0
      %v837 = vadd.f32 %v734, %v836
      %838 = vmatmul.f32.gmra.mxu0 %v771
      %v839 = vpop.f32.mrf.mxu0
      %v840 = vadd.f32 %v734, %v839
      %841 = vmatmul.f32.gmra.mxu0 %v774
      %v842 = vpop.f32.mrf.mxu0
      %v843 = vadd.f32 %v734, %v842
      %844 = vmatmul.f32.gmra.mxu0 %v777
      %v845 = vpop.f32.mrf.mxu0
      %v846 = vadd.f32 %v734, %v845
      %847 = vmatmul.f32.gmra.mxu0 %v780
      %v848 = vpop.f32.mrf.mxu0
      %v849 = vadd.f32 %v734, %v848
      %850 = vmatmul.f32.gmra.mxu0 %v783
      %v851 = vpop.f32.mrf.mxu0
      %v852 = vadd.f32 %v734, %v851
      %853 = vdwg.mxu0
      %v854 = vadd.f32 %v807, %v457
      %v855 = vadd.f32 %v810, %v458
      %v856 = vadd.f32 %v813, %v459
      %v857 = vadd.f32 %v816, %v460
      %v858 = vadd.f32 %v819, %v461
      %v859 = vadd.f32 %v822, %v462
      %v860 = vadd.f32 %v825, %v463
      %v861 = vadd.f32 %v828, %v464
      %v862 = vadd.f32 %v831, %v465
      %v863 = vadd.f32 %v834, %v466
      %v864 = vadd.f32 %v837, %v467
      %v865 = vadd.f32 %v840, %v468
      %v866 = vadd.f32 %v843, %v469
      %v867 = vadd.f32 %v846, %v470
      %v868 = vadd.f32 %v849, %v471
      %v869 = vadd.f32 %v852, %v472
      %v870 = vmax.f32 %v854, 0.0
      %v871 = vmax.f32 %v855, 0.0
      %v872 = vmax.f32 %v856, 0.0
      %v873 = vmax.f32 %v857, 0.0
      %v874 = vmax.f32 %v858, 0.0
      %v875 = vmax.f32 %v859, 0.0
      %v876 = vmax.f32 %v860, 0.0
      %v877 = vmax.f32 %v861, 0.0
      %v878 = vmax.f32 %v862, 0.0
      %v879 = vmax.f32 %v863, 0.0
      %v880 = vmax.f32 %v864, 0.0
      %v881 = vmax.f32 %v865, 0.0
      %v882 = vmax.f32 %v866, 0.0
      %v883 = vmax.f32 %v867, 0.0
      %v884 = vmax.f32 %v868, 0.0
      %v885 = vmax.f32 %v869, 0.0
      %886 = vst.msk [vmem:[%s248] sm:$0xff] %vm736, %v870
      %887 = vst.msk [vmem:[%s248 + $0x8] sm:$0xff] %vm736, %v871
      %888 = vst.msk [vmem:[%s248 + $0x10] sm:$0xff] %vm736, %v872
      %889 = vst.msk [vmem:[%s248 + $0x18] sm:$0xff] %vm736, %v873
      %890 = vst.msk [vmem:[%s248 + $0x20] sm:$0xff] %vm736, %v874
      %891 = vst.msk [vmem:[%s248 + $0x28] sm:$0xff] %vm736, %v875
      %892 = vst.msk [vmem:[%s248 + $0x30] sm:$0xff] %vm736, %v876
      %893 = vst.msk [vmem:[%s248 + $0x38] sm:$0xff] %vm736, %v877
      %894 = vst.msk [vmem:[%s248 + $0x40] sm:$0xff] %vm736, %v878
      %895 = vst.msk [vmem:[%s248 + $0x48] sm:$0xff] %vm736, %v879
      %896 = vst.msk [vmem:[%s248 + $0x50] sm:$0xff] %vm736, %v880
      %897 = vst.msk [vmem:[%s248 + $0x58] sm:$0xff] %vm736, %v881
      %898 = vst.msk [vmem:[%s248 + $0x60] sm:$0xff] %vm736, %v882
      %899 = vst.msk [vmem:[%s248 + $0x68] sm:$0xff] %vm736, %v883
      %900 = vst.msk [vmem:[%s248 + $0x70] sm:$0xff] %vm736, %v884
      %901 = vst.msk [vmem:[%s248 + $0x78] sm:$0xff] %vm736, %v885
      %s902 = smul.u32 8, %s21
      %p903 = scmp.lt.s32.totalorder %s20, 1
      %s904 = scalar_select %p903, %s20, 1
      %p905 = scmp.lt.s32.totalorder %s902, 15
      %s906 = scalar_select %p905, %s902, 15
      %s907 = smul.addr %s906, 2
      %s908 = smul.addr %s904, 32
      %s909 = sadd.s32 %s907, %s908
      %s910 = smul.addr %s909, 8
      %s911 = scalar_lea.vmem %s5, %s910
      // Predicated region
      $region41: #{tpu_custom_call.1} parent=39 // pred_check
        %p912 = pneg %p158
      $region42: #{tpu_custom_call.1} parent=39 // pred_check_branch
        %914 = sbr.rel (%p912) target = $region44
      $region43: #{tpu_custom_call.1} parent=39 // pred_region
        %s915 = smul.u32 8, %s21
      $region44: #{tpu_custom_call.1} parent=39 // pred_fallthru
        _
    $region40: #{tpu_custom_call.1} parent=5 // pred_fallthru
      _
    %p916 = scmp.le.s32.totalorder 2, %s11
    // Predicated region
    $region45: #{tpu_custom_call.1} parent=5 // pred_check
      %p917 = pneg %p916
    $region46: #{tpu_custom_call.1} parent=5 // pred_check_branch
      %919 = sbr.rel (%p917) target = $region48
    $region47: #{tpu_custom_call.1} parent=5 // pred_region
      %s920 = ssub.s32 %s11, 2
      // Predicated region
      $region49: #{tpu_custom_call.1} parent=47 // pred_check
        %p921 = pneg %p164
      $region50: #{tpu_custom_call.1} parent=47 // pred_check_branch
        %923 = sbr.rel (%p921) target = $region52
      $region51: #{tpu_custom_call.1} parent=47 // pred_region
        %s924 = smul.u32 8, %s23
        %p925 = scmp.lt.s32.totalorder %s22, 1
        %s926 = scalar_select %p925, %s22, 1
        %p927 = scmp.lt.s32.totalorder %s924, 15
        %s928 = scalar_select %p927, %s924, 15
        %s929 = smul.addr %s928, 2
        %s930 = smul.addr %s926, 32
        %s931 = sadd.s32 %s929, %s930
        %s932 = smul.addr %s931, 8
        %s933 = scalar_lea.vmem %s5, %s932
      $region52: #{tpu_custom_call.1} parent=47 // pred_fallthru
        _
    $region48: #{tpu_custom_call.1} parent=5 // pred_fallthru
      _
  $region6: #{tpu_custom_call.1} parent=0 // loop_footer
    %s15 = sadd.s32 1, %s11
  $region7: #{tpu_custom_call.1} parent=0 // loop_footer_branch
    %10 = sbr.rel target = $region3
  $region8: #{tpu_custom_call.1} parent=0 // loop_exit
    _

</llo_original>
